<compile_context>
chip_gen: v5e
topology: v5e:2x2
jax: 0.10.0
libtpu: 0.0.40
codegen_flags: <defaults>
</compile_context>

<pallas_src>
import functools

import jax
import jax.numpy as jnp
from jax.experimental import pallas as pl
from jax.experimental.pallas import tpu as pltpu


# ---------------------------------------------------------------------------
# constants / helpers
# ---------------------------------------------------------------------------
_NEG_BIAS = -1e30                 # masks padded logits out of the logsumexp
_WEIGHT_TILE_BYTES = 13 * 2**20   # per-buffer weight-tile budget (bf16)
_MAX_TN = 1792                    # lane-dim tile cap (12544 = 7 * 1792)
_TAIL_WEIGHT_BYTES = 16 * 2**20   # total VMEM-resident tail weight budget
_VMEM_LIMIT = 48 * 2**20          # scoped VMEM limit (safe on v5e/v6e/v7x)


def _round_up(x, m):
    return (x + m - 1) // m * m


def _pad_batch(b):
    if b <= 512:
        return max(16, _round_up(b, 16))
    return _round_up(b, 256)


def _divisor_tiles(dim):
    """Divisors of `dim` that are multiples of 128, descending."""
    assert dim % 128 == 0, dim
    q = dim // 128
    return [128 * d for d in range(q, 0, -1) if q % d == 0]


def _choose_tn(n):
    """Largest 128-multiple divisor of n <= _MAX_TN; prefer >=2 N blocks
    (for v7x's two TensorCores) when a >=256-wide multi-block divisor exists."""
    tiles = [t for t in _divisor_tiles(n) if t <= _MAX_TN] or [_divisor_tiles(n)[-1]]
    multi = [t for t in tiles if n // t >= 2 and t >= 256]
    return multi[0] if multi else tiles[0]


def _choose_tk(k, tn):
    """Largest 128-multiple divisor of k whose (tk, tn) bf16 weight tile fits
    the per-buffer budget."""
    tiles = _divisor_tiles(k)
    for t in tiles:
        if t * tn * 2 <= _WEIGHT_TILE_BYTES:
            return t
    return tiles[-1]


# ---------------------------------------------------------------------------
# Pallas kernel 1: tiled, streamed  y = act(x @ W_t + b)   (wide layers)
# ---------------------------------------------------------------------------
def _linear_kernel(x_ref, w_ref, b_ref, o_ref, acc_ref, *, activation):
    k = pl.program_id(2)

    @pl.when(k == 0)
    def _init():
        acc_ref[...] = jnp.zeros_like(acc_ref)

    acc_ref[...] += jnp.dot(
        x_ref[...], w_ref[...], preferred_element_type=jnp.float32)

    @pl.when(k == pl.num_programs(2) - 1)
    def _finalize():
        y = acc_ref[...] + b_ref[...]          # f32
        if activation == "relu":
            y = jnp.maximum(y, 0.0)
        o_ref[...] = y.astype(o_ref.dtype)


def pallas_linear(x, w_t, b, *, activation="relu", out_dtype=jnp.bfloat16):
    """Tiled fused linear layer for wide (HBM-streamed) weights.

    x   : (M, K)  bf16 activations   (M a multiple of 16, K of 128)
    w_t : (K, N)  bf16 transposed weight (K, N multiples of 128)
    b   : (1, N)  f32 bias
    """
    M, K = x.shape
    K2, N = w_t.shape
    assert K == K2 and b.shape == (1, N)

    tm = M if M <= 512 else 256        # never re-stream weights for small M
    tn = _choose_tn(N)
    tk = _choose_tk(K, tn)
    grid = (M // tm, N // tn, K // tk)

    cost = pl.CostEstimate(
        flops=2 * M * N * K,
        transcendentals=0,
        bytes_accessed=(x.size * x.dtype.itemsize * (N // tn)
                        + w_t.size * w_t.dtype.itemsize * (M // tm)
                        + b.size * b.dtype.itemsize * (M // tm)
                        + M * N * jnp.dtype(out_dtype).itemsize),
    )

    kernel = functools.partial(_linear_kernel, activation=activation)
    return pl.pallas_call(
        kernel,
        out_shape=jax.ShapeDtypeStruct((M, N), out_dtype),
        grid_spec=pltpu.PrefetchScalarGridSpec(
            num_scalar_prefetch=0,
            grid=grid,
            in_specs=[
                pl.BlockSpec((tm, tk), lambda i, j, k: (i, k)),
                pl.BlockSpec((tk, tn), lambda i, j, k: (k, j)),
                pl.BlockSpec((1, tn), lambda i, j, k: (0, j)),
            ],
            out_specs=pl.BlockSpec((tm, tn), lambda i, j, k: (i, j)),
            scratch_shapes=[pltpu.VMEM((tm, tn), jnp.float32)],
        ),
        compiler_params=pltpu.CompilerParams(
            dimension_semantics=("parallel", "parallel", "arbitrary"),
            vmem_limit_bytes=_VMEM_LIMIT),
        cost_estimate=cost,
    )(x, w_t, b)


# ---------------------------------------------------------------------------
# Pallas kernel 2: fused small-tail layers (weights VMEM-resident)
#   h -> [Linear+ReLU]* -> Linear -> LogSoftmax, all in one kernel body.
# ---------------------------------------------------------------------------
def _tail_kernel(*refs, n_layers):
    x_ref = refs[0]
    o_ref = refs[1 + 2 * n_layers]
    h = x_ref[...]                                    # bf16
    for l in range(n_layers):
        w = refs[1 + 2 * l][...]                      # bf16 (K, N)
        bias = refs[2 + 2 * l][...]                   # f32  (1, N)
        y = jnp.dot(h, w, preferred_element_type=jnp.float32) + bias
        if l < n_layers - 1:
            # ReLU (+ Dropout p=0.3 == identity in eval mode)
            h = jnp.maximum(y, 0.0).astype(jnp.bfloat16)
        else:
            # LogSoftmax in f32; padded columns carry -1e30 bias -> vanish.
            m = jnp.max(y, axis=1, keepdims=True)
            z = y - m
            lse = jnp.log(jnp.sum(jnp.exp(z), axis=1, keepdims=True))
            o_ref[...] = (z - lse).astype(o_ref.dtype)


def pallas_tail(x, layers):
    """One pallas_call for all small tail layers (incl. output + log_softmax)."""
    M, K0 = x.shape
    n_layers = len(layers)
    n_out = layers[-1][0].shape[1]
    tm = M if M <= 512 else 256
    grid = (M // tm,)

    in_specs = [pl.BlockSpec((tm, K0), lambda i: (i, 0))]
    args = [x]
    for (w_t, b) in layers:
        kw, nw = w_t.shape
        in_specs.append(pl.BlockSpec((kw, nw), lambda i: (0, 0)))
        in_specs.append(pl.BlockSpec((1, nw), lambda i: (0, 0)))
        args.extend([w_t, b])

    kernel = functools.partial(_tail_kernel, n_layers=n_layers)
    return pl.pallas_call(
        kernel,
        out_shape=jax.ShapeDtypeStruct((M, n_out), jnp.float32),
        grid_spec=pltpu.PrefetchScalarGridSpec(
            num_scalar_prefetch=0,
            grid=grid,
            in_specs=in_specs,
            out_specs=pl.BlockSpec((tm, n_out), lambda i: (i, 0)),
        ),
        compiler_params=pltpu.CompilerParams(
            dimension_semantics=("parallel",),
            vmem_limit_bytes=_VMEM_LIMIT),
    )(*args)


# ---------------------------------------------------------------------------
# Model construction (mirrors myVGG.__init__ layer-size logic)
# ---------------------------------------------------------------------------
def build_layer_dims(size, n_start=25088, min_n=204):
    """Replicates the while-loops in myVGG.__init__."""
    dims = []
    n = n_start
    i = 0
    while i < size and n > min_n:
        dims.append((int(n), int(int(n) / 2)))
        i += 1
        n = n / 2
    while i < size:
        dims.append((int(n), int(n)))
        i += 1
    dims.append((int(n), 102))  # self.output
    return dims  # list of (in_features, out_features); last entry is output


def init_params(key, dims):
    """PyTorch-style Linear init, pre-transposed / 128-padded / bf16 weights.

    Returns list of (w_t bf16 (K_pad, N_pad), b f32 (1, N_pad)).  Padded
    weight rows/cols are zero; the final layer's padded bias columns are a
    large negative so they vanish from the logsumexp.
    """
    params = []
    n_layers = len(dims)
    for idx, (fan_in, fan_out) in enumerate(dims):
        key, kw, kb = jax.random.split(key, 3)
        bound = 1.0 / jnp.sqrt(float(fan_in))
        w = jax.random.uniform(kw, (fan_out, fan_in), jnp.float32, -bound, bound)
        b = jax.random.uniform(kb, (fan_out,), jnp.float32, -bound, bound)

        k_pad = _round_up(fan_in, 128)
        n_pad = _round_up(fan_out, 128)
        w_t = jnp.zeros((k_pad, n_pad), jnp.float32).at[:fan_in, :fan_out].set(w.T)
        fill = _NEG_BIAS if idx == n_layers - 1 else 0.0
        b_row = jnp.full((1, n_pad), fill, jnp.float32).at[0, :fan_out].set(b)
        params.append((w_t.astype(jnp.bfloat16), b_row))
    return params


def _split_wide_tail(params, tail_max_width):
    """Split layers into wide (streamed/tiled) prefix and small fused tail.

    The output layer is always in the tail (it carries the log_softmax);
    additional trailing hidden layers are folded in while their padded widths
    are <= tail_max_width and the total weight bytes fit the VMEM budget.
    """
    n_tail = 1
    used = params[-1][0].size * 2 + params[-1][1].size * 4
    for (w_t, b) in reversed(params[:-1]):
        k, n = w_t.shape
        wbytes = w_t.size * 2 + b.size * 4
        if (k <= tail_max_width and n <= tail_max_width
                and used + wbytes <= _TAIL_WEIGHT_BYTES):
            n_tail += 1
            used += wbytes
        else:
            break
    cut = len(params) - n_tail
    return params[:cut], params[cut:]


def my_vgg_forward(x, params, out_features=102, tail_max_width=2048):
    """Forward pass of myVGG.  x: (B, n_start) f32 -> (B, 102) f32 log-probs."""
    B, n_in = x.shape
    k_pad0 = params[0][0].shape[0]
    m_pad = _pad_batch(B)

    h = jnp.zeros((m_pad, k_pad0), jnp.bfloat16).at[:B, :n_in].set(
        x.astype(jnp.bfloat16))

    wide, tail = _split_wide_tail(params, tail_max_width)

    for (w_t, b) in wide:
        # Linear -> ReLU -> Dropout(p=0.3) [identity in eval mode]
        h = pallas_linear(h, w_t, b, activation="relu", out_dtype=jnp.bfloat16)

    y = pallas_tail(h, tail)          # fused small layers + output + log_softmax
    return y[:B, :out_features]


# ---------------------------------------------------------------------------
# Pure-JAX reference (same padded bf16 params, f32 accumulation)
# ---------------------------------------------------------------------------
def my_vgg_ref(x, params, out_features=102):
    *hidden, output = params
    k_pad0 = params[0][0].shape[0]
    B, n_in = x.shape
    h = jnp.zeros((B, k_pad0), jnp.bfloat16).at[:, :n_in].set(
        x.astype(jnp.bfloat16))
    for (w_t, b) in hidden:
        y = jnp.dot(h, w_t, preferred_element_type=jnp.float32) + b
        h = jnp.maximum(y, 0.0).astype(jnp.bfloat16)
    w_t, b = output
    y = jnp.dot(h, w_t, preferred_element_type=jnp.float32) + b
    return jax.nn.log_softmax(y, axis=1)[:, :out_features]


if __name__ == "__main__":
    # Small, structure-faithful configuration:
    #   size=3, n_start=512, threshold 204
    #   -> hidden: Linear(512,256), Linear(256,128), Linear(128,128)
    #   -> output: Linear(128,102)
    # tail_max_width=256 so both kernel paths (streamed wide layer + fused
    # tail) are exercised at these small shapes.
    size = 3
    n_start = 512
    batch = 4

    dims = build_layer_dims(size, n_start=n_start, min_n=204)
    key = jax.random.PRNGKey(0)
    key, kx = jax.random.split(key)
    params = init_params(key, dims)

    x = jax.random.normal(kx, (batch, n_start), jnp.float32)

    fwd = jax.jit(functools.partial(my_vgg_forward, tail_max_width=256))
    out = jax.block_until_ready(fwd(x, params))

    ref = my_vgg_ref(x, params)
    assert out.shape == (batch, 102), out.shape
    max_err = float(jnp.max(jnp.abs(out - ref)))
    assert jnp.allclose(out, ref, atol=2e-2, rtol=2e-2), max_err

    print("KERNEL_OK")
</pallas_src>

<mosaic_0001>
module attributes {stable_mosaic.version = 11 : i64} {
  func.func @_tail_kernel(%arg0: i32, %arg1: memref<16x256xbf16, #tpu.memory_space<vmem>>, %arg2: memref<256x128xbf16, #tpu.memory_space<vmem>>, %arg3: memref<1x128xf32, #tpu.memory_space<vmem>>, %arg4: memref<128x128xbf16, #tpu.memory_space<vmem>>, %arg5: memref<1x128xf32, #tpu.memory_space<vmem>>, %arg6: memref<128x128xbf16, #tpu.memory_space<vmem>>, %arg7: memref<1x128xf32, #tpu.memory_space<vmem>>, %arg8: memref<16x128xf32, #tpu.memory_space<vmem>>) attributes {dimension_semantics = [#tpu.dimension_semantics<parallel>], iteration_bounds = array<i64: 1>, scalar_prefetch = 0 : i64, scratch_operands = 0 : i64, tpu.core_type = #tpu.core_type<tc>, window_params = [{transform_indices = @transform_0, window_bounds = array<i64: 16, 256>}, {pipeline_mode = #tpu.pipeline_mode<synchronous>, transform_indices = @transform_1, window_bounds = array<i64: 256, 128>}, {pipeline_mode = #tpu.pipeline_mode<synchronous>, transform_indices = @transform_2, window_bounds = array<i64: 1, 128>}, {pipeline_mode = #tpu.pipeline_mode<synchronous>, transform_indices = @transform_3, window_bounds = array<i64: 128, 128>}, {pipeline_mode = #tpu.pipeline_mode<synchronous>, transform_indices = @transform_4, window_bounds = array<i64: 1, 128>}, {pipeline_mode = #tpu.pipeline_mode<synchronous>, transform_indices = @transform_5, window_bounds = array<i64: 128, 128>}, {pipeline_mode = #tpu.pipeline_mode<synchronous>, transform_indices = @transform_6, window_bounds = array<i64: 1, 128>}, {transform_indices = @transform_7, window_bounds = array<i64: 16, 128>}]} {
    %c0 = arith.constant 0 : index
    %c0_0 = arith.constant 0 : index
    %0 = vector.load %arg1[%c0, %c0_0] : memref<16x256xbf16, #tpu.memory_space<vmem>>, vector<16x256xbf16>
    %c0_1 = arith.constant 0 : index
    %c0_2 = arith.constant 0 : index
    %1 = vector.load %arg2[%c0_1, %c0_2] : memref<256x128xbf16, #tpu.memory_space<vmem>>, vector<256x128xbf16>
    %c0_3 = arith.constant 0 : index
    %c0_4 = arith.constant 0 : index
    %2 = vector.load %arg3[%c0_3, %c0_4] : memref<1x128xf32, #tpu.memory_space<vmem>>, vector<1x128xf32>
    %cst = arith.constant dense<0.000000e+00> : vector<16x128xf32>
    %3 = tpu.matmul %0, %1, %cst {dimension_numbers = #tpu.dot_dimension_numbers<[1], [0], [0], [1], [0, 0, 1, 1], [], []>} : vector<16x256xbf16>, vector<256x128xbf16>, vector<16x128xf32> -> vector<16x128xf32>
    %4 = vector.broadcast %2 : vector<1x128xf32> to vector<16x128xf32>
    %5 = arith.addf %3, %4 : vector<16x128xf32>
    %cst_5 = arith.constant 0.000000e+00 : f32
    %6 = vector.broadcast %cst_5 : f32 to vector<16x128xf32>
    %7 = arith.maximumf %5, %6 : vector<16x128xf32>
    %8 = arith.truncf %7 : vector<16x128xf32> to vector<16x128xbf16>
    %c0_6 = arith.constant 0 : index
    %c0_7 = arith.constant 0 : index
    %9 = vector.load %arg4[%c0_6, %c0_7] : memref<128x128xbf16, #tpu.memory_space<vmem>>, vector<128x128xbf16>
    %c0_8 = arith.constant 0 : index
    %c0_9 = arith.constant 0 : index
    %10 = vector.load %arg5[%c0_8, %c0_9] : memref<1x128xf32, #tpu.memory_space<vmem>>, vector<1x128xf32>
    %cst_10 = arith.constant dense<0.000000e+00> : vector<16x128xf32>
    %11 = tpu.matmul %8, %9, %cst_10 {dimension_numbers = #tpu.dot_dimension_numbers<[1], [0], [0], [1], [0, 0, 1, 1], [], []>} : vector<16x128xbf16>, vector<128x128xbf16>, vector<16x128xf32> -> vector<16x128xf32>
    %12 = vector.broadcast %10 : vector<1x128xf32> to vector<16x128xf32>
    %13 = arith.addf %11, %12 : vector<16x128xf32>
    %cst_11 = arith.constant 0.000000e+00 : f32
    %14 = vector.broadcast %cst_11 : f32 to vector<16x128xf32>
    %15 = arith.maximumf %13, %14 : vector<16x128xf32>
    %16 = arith.truncf %15 : vector<16x128xf32> to vector<16x128xbf16>
    %c0_12 = arith.constant 0 : index
    %c0_13 = arith.constant 0 : index
    %17 = vector.load %arg6[%c0_12, %c0_13] : memref<128x128xbf16, #tpu.memory_space<vmem>>, vector<128x128xbf16>
    %c0_14 = arith.constant 0 : index
    %c0_15 = arith.constant 0 : index
    %18 = vector.load %arg7[%c0_14, %c0_15] : memref<1x128xf32, #tpu.memory_space<vmem>>, vector<1x128xf32>
    %cst_16 = arith.constant dense<0.000000e+00> : vector<16x128xf32>
    %19 = tpu.matmul %16, %17, %cst_16 {dimension_numbers = #tpu.dot_dimension_numbers<[1], [0], [0], [1], [0, 0, 1, 1], [], []>} : vector<16x128xbf16>, vector<128x128xbf16>, vector<16x128xf32> -> vector<16x128xf32>
    %20 = vector.broadcast %18 : vector<1x128xf32> to vector<16x128xf32>
    %21 = arith.addf %19, %20 : vector<16x128xf32>
    %cst_17 = arith.constant dense<0xFF800000> : vector<16xf32>
    %22 = vector.multi_reduction <maximumf>, %21, %cst_17 [1] : vector<16x128xf32> to vector<16xf32>
    %23 = vector.shape_cast %22 : vector<16xf32> to vector<16x1xf32>
    %24 = vector.broadcast %23 : vector<16x1xf32> to vector<16x128xf32>
    %25 = arith.subf %21, %24 : vector<16x128xf32>
    %26 = math.exp %25 : vector<16x128xf32>
    %cst_18 = arith.constant dense<0.000000e+00> : vector<16xf32>
    %27 = vector.multi_reduction <add>, %26, %cst_18 [1] : vector<16x128xf32> to vector<16xf32>
    %28 = vector.shape_cast %27 : vector<16xf32> to vector<16x1xf32>
    %29 = math.log %28 : vector<16x1xf32>
    %30 = vector.broadcast %29 : vector<16x1xf32> to vector<16x128xf32>
    %31 = arith.subf %25, %30 : vector<16x128xf32>
    %c0_19 = arith.constant 0 : index
    %c0_20 = arith.constant 0 : index
    %32 = vector.load %arg8[%c0_19, %c0_20] : memref<16x128xf32, #tpu.memory_space<vmem>>, vector<16x128xf32>
    tpu.vector_store %arg8[%c0_19, %c0_20], %31 {strides = array<i32>} : memref<16x128xf32, #tpu.memory_space<vmem>>, vector<16x128xf32>,
    return
  }
  func.func @transform_0(%arg0: i32) -> (i32, i32) {
    %c0_i32 = arith.constant 0 : i32
    %c0_i32_0 = arith.constant 0 : i32
    return %arg0, %c0_i32 : i32, i32
  }
  func.func @transform_1(%arg0: i32) -> (i32, i32) {
    %c0_i32 = arith.constant 0 : i32
    %c0_i32_0 = arith.constant 0 : i32
    %c0_i32_1 = arith.constant 0 : i32
    return %c0_i32, %c0_i32_0 : i32, i32
  }
  func.func @transform_2(%arg0: i32) -> (i32, i32) {
    %c0_i32 = arith.constant 0 : i32
    %c0_i32_0 = arith.constant 0 : i32
    %c0_i32_1 = arith.constant 0 : i32
    return %c0_i32, %c0_i32_0 : i32, i32
  }
  func.func @transform_3(%arg0: i32) -> (i32, i32) {
    %c0_i32 = arith.constant 0 : i32
    %c0_i32_0 = arith.constant 0 : i32
    %c0_i32_1 = arith.constant 0 : i32
    return %c0_i32, %c0_i32_0 : i32, i32
  }
  func.func @transform_4(%arg0: i32) -> (i32, i32) {
    %c0_i32 = arith.constant 0 : i32
    %c0_i32_0 = arith.constant 0 : i32
    %c0_i32_1 = arith.constant 0 : i32
    return %c0_i32, %c0_i32_0 : i32, i32
  }
  func.func @transform_5(%arg0: i32) -> (i32, i32) {
    %c0_i32 = arith.constant 0 : i32
    %c0_i32_0 = arith.constant 0 : i32
    %c0_i32_1 = arith.constant 0 : i32
    return %c0_i32, %c0_i32_0 : i32, i32
  }
  func.func @transform_6(%arg0: i32) -> (i32, i32) {
    %c0_i32 = arith.constant 0 : i32
    %c0_i32_0 = arith.constant 0 : i32
    %c0_i32_1 = arith.constant 0 : i32
    return %c0_i32, %c0_i32_0 : i32, i32
  }
  func.func @transform_7(%arg0: i32) -> (i32, i32) {
    %c0_i32 = arith.constant 0 : i32
    %c0_i32_0 = arith.constant 0 : i32
    return %arg0, %c0_i32 : i32, i32
  }
}

module attributes {stable_mosaic.version = 11 : i64} {
  func.func @_linear_kernel(%arg0: i32, %arg1: i32, %arg2: i32, %arg3: memref<16x512xbf16, #tpu.memory_space<vmem>>, %arg4: memref<512x256xbf16, #tpu.memory_space<vmem>>, %arg5: memref<1x256xf32, #tpu.memory_space<vmem>>, %arg6: memref<16x256xbf16, #tpu.memory_space<vmem>>, %arg7: memref<16x256xf32, #tpu.memory_space<vmem>>) attributes {dimension_semantics = [#tpu.dimension_semantics<parallel>, #tpu.dimension_semantics<parallel>, #tpu.dimension_semantics<arbitrary>], iteration_bounds = array<i64: 1, 1, 1>, scalar_prefetch = 0 : i64, scratch_operands = 1 : i64, tpu.core_type = #tpu.core_type<tc>, window_params = [{transform_indices = @transform_0, window_bounds = array<i64: 16, 512>}, {transform_indices = @transform_1, window_bounds = array<i64: 512, 256>}, {transform_indices = @transform_2, window_bounds = array<i64: 1, 256>}, {transform_indices = @transform_3, window_bounds = array<i64: 16, 256>}]} {
    %c0_i32 = arith.constant 0 : i32
    %0 = arith.cmpi eq, %arg2, %c0_i32 : i32
    %1 = arith.extui %0 : i1 to i32
    %c0_i32_0 = arith.constant 0 : i32
    %2 = arith.cmpi ne, %1, %c0_i32_0 : i32
    scf.if %2 {
      %cst_10 = arith.constant 0.000000e+00 : f32
      %12 = vector.broadcast %cst_10 : f32 to vector<16x256xf32>
      %c0_11 = arith.constant 0 : index
      %c0_12 = arith.constant 0 : index
      %13 = vector.load %arg7[%c0_11, %c0_12] : memref<16x256xf32, #tpu.memory_space<vmem>>, vector<16x256xf32>
      tpu.vector_store %arg7[%c0_11, %c0_12], %12 {strides = array<i32>} : memref<16x256xf32, #tpu.memory_space<vmem>>, vector<16x256xf32>,
    } else {
    }
    %c0 = arith.constant 0 : index
    %c0_1 = arith.constant 0 : index
    %3 = vector.load %arg7[%c0, %c0_1] : memref<16x256xf32, #tpu.memory_space<vmem>>, vector<16x256xf32>
    %c0_2 = arith.constant 0 : index
    %c0_3 = arith.constant 0 : index
    %4 = vector.load %arg3[%c0_2, %c0_3] : memref<16x512xbf16, #tpu.memory_space<vmem>>, vector<16x512xbf16>
    %c0_4 = arith.constant 0 : index
    %c0_5 = arith.constant 0 : index
    %5 = vector.load %arg4[%c0_4, %c0_5] : memref<512x256xbf16, #tpu.memory_space<vmem>>, vector<512x256xbf16>
    %cst = arith.constant dense<0.000000e+00> : vector<16x256xf32>
    %6 = tpu.matmul %4, %5, %cst {dimension_numbers = #tpu.dot_dimension_numbers<[1], [0], [0], [1], [0, 0, 1, 1], [], []>} : vector<16x512xbf16>, vector<512x256xbf16>, vector<16x256xf32> -> vector<16x256xf32>
    %7 = arith.addf %3, %6 : vector<16x256xf32>
    %c0_6 = arith.constant 0 : index
    %c0_7 = arith.constant 0 : index
    %8 = vector.load %arg7[%c0_6, %c0_7] : memref<16x256xf32, #tpu.memory_space<vmem>>, vector<16x256xf32>
    tpu.vector_store %arg7[%c0_6, %c0_7], %7 {strides = array<i32>} : memref<16x256xf32, #tpu.memory_space<vmem>>, vector<16x256xf32>,
    %c0_i32_8 = arith.constant 0 : i32
    %9 = arith.cmpi eq, %arg2, %c0_i32_8 : i32
    %10 = arith.extui %9 : i1 to i32
    %c0_i32_9 = arith.constant 0 : i32
    %11 = arith.cmpi ne, %10, %c0_i32_9 : i32
    scf.if %11 {
      %c0_10 = arith.constant 0 : index
      %c0_11 = arith.constant 0 : index
      %12 = vector.load %arg7[%c0_10, %c0_11] : memref<16x256xf32, #tpu.memory_space<vmem>>, vector<16x256xf32>
      %c0_12 = arith.constant 0 : index
      %c0_13 = arith.constant 0 : index
      %13 = vector.load %arg5[%c0_12, %c0_13] : memref<1x256xf32, #tpu.memory_space<vmem>>, vector<1x256xf32>
      %14 = vector.broadcast %13 : vector<1x256xf32> to vector<16x256xf32>
      %15 = arith.addf %12, %14 : vector<16x256xf32>
      %cst_14 = arith.constant 0.000000e+00 : f32
      %16 = vector.broadcast %cst_14 : f32 to vector<16x256xf32>
      %17 = arith.maximumf %15, %16 : vector<16x256xf32>
      %18 = arith.truncf %17 : vector<16x256xf32> to vector<16x256xbf16>
      %c0_15 = arith.constant 0 : index
      %c0_16 = arith.constant 0 : index
      %19 = vector.load %arg6[%c0_15, %c0_16] : memref<16x256xbf16, #tpu.memory_space<vmem>>, vector<16x256xbf16>
      tpu.vector_store %arg6[%c0_15, %c0_16], %18 {strides = array<i32>} : memref<16x256xbf16, #tpu.memory_space<vmem>>, vector<16x256xbf16>,
    } else {
    }
    return
  }
  func.func @transform_0(%arg0: i32, %arg1: i32, %arg2: i32) -> (i32, i32) {
    %c0_i32 = arith.constant 0 : i32
    return %arg0, %arg2 : i32, i32
  }
  func.func @transform_1(%arg0: i32, %arg1: i32, %arg2: i32) -> (i32, i32) {
    %c0_i32 = arith.constant 0 : i32
    return %arg2, %arg1 : i32, i32
  }
  func.func @transform_2(%arg0: i32, %arg1: i32, %arg2: i32) -> (i32, i32) {
    %c0_i32 = arith.constant 0 : i32
    %c0_i32_0 = arith.constant 0 : i32
    return %c0_i32, %arg1 : i32, i32
  }
  func.func @transform_3(%arg0: i32, %arg1: i32, %arg2: i32) -> (i32, i32) {
    %c0_i32 = arith.constant 0 : i32
    return %arg0, %arg1 : i32, i32
  }
}

</mosaic_0001>

<llo_original>
// kernel: my_vgg_forward.3
$region0: #{my_vgg_forward.3}
  #allocation0 [shape = 'u32[]', space=smem, size = 0x4, offset = 0x4, fixed_abs, tag = 'smem constant byte address 0x4 - core index']
  #allocation1 [shape = 'u32[72,128]{1,0:T(1,128)}', space=vmem, size = 0x9000, scoped, tag = 'internal scratch']
  %s0 = inlined_call_operand.vmem [shape: bf16[16,256], index: 0, kind: input, shape index: {}]
  %s1 = inlined_call_operand.vmem [shape: bf16[256,128], index: 1, kind: input, shape index: {}]
  %s2 = inlined_call_operand.vmem [shape: f32[1,128], index: 2, kind: input, shape index: {}]
  %s3 = inlined_call_operand.vmem [shape: bf16[128,128], index: 3, kind: input, shape index: {}]
  %s4 = inlined_call_operand.vmem [shape: f32[1,128], index: 4, kind: input, shape index: {}]
  %s5 = inlined_call_operand.vmem [shape: bf16[128,128], index: 5, kind: input, shape index: {}]
  %s6 = inlined_call_operand.vmem [shape: f32[1,128], index: 6, kind: input, shape index: {}]
  %s7 = inlined_call_operand.vmem [shape: f32[16,128], index: 7, kind: output, shape index: {}]
  %s8 = sld [smem:[#allocation0]]
  $region38: #{my_vgg_forward.3} parent=0
    _
  %s10 = ssub.s32 1, %s8
  %s11 = scalar_select 0, %s10, %s8
  // Predicated region
  $region2: #{my_vgg_forward.3} parent=0 // pred_check
    _
  $region3: #{my_vgg_forward.3} parent=0 // pred_check_branch
    %13 = sbr.rel (0) target = $region5
  $region4: #{my_vgg_forward.3} parent=0 // pred_region
    _
  $region5: #{my_vgg_forward.3} parent=0 // pred_fallthru
    _
  // Predicated region
  $region6: #{my_vgg_forward.3} parent=0 // pred_check
    _
  $region7: #{my_vgg_forward.3} parent=0 // pred_check_branch
    %15 = sbr.rel (0) target = $region9
  $region8: #{my_vgg_forward.3} parent=0 // pred_region
    _
  $region9: #{my_vgg_forward.3} parent=0 // pred_fallthru
    _
  // Predicated region
  $region10: #{my_vgg_forward.3} parent=0 // pred_check
    _
  $region11: #{my_vgg_forward.3} parent=0 // pred_check_branch
    %17 = sbr.rel (0) target = $region13
  $region12: #{my_vgg_forward.3} parent=0 // pred_region
    _
  $region13: #{my_vgg_forward.3} parent=0 // pred_fallthru
    _
  // Predicated region
  $region14: #{my_vgg_forward.3} parent=0 // pred_check
    _
  $region15: #{my_vgg_forward.3} parent=0 // pred_check_branch
    %19 = sbr.rel (0) target = $region17
  $region16: #{my_vgg_forward.3} parent=0 // pred_region
    _
  $region17: #{my_vgg_forward.3} parent=0 // pred_fallthru
    _
  // Predicated region
  $region18: #{my_vgg_forward.3} parent=0 // pred_check
    _
  $region19: #{my_vgg_forward.3} parent=0 // pred_check_branch
    %21 = sbr.rel (0) target = $region21
  $region20: #{my_vgg_forward.3} parent=0 // pred_region
    _
  $region21: #{my_vgg_forward.3} parent=0 // pred_fallthru
    _
  // Predicated region
  $region22: #{my_vgg_forward.3} parent=0 // pred_check
    _
  $region23: #{my_vgg_forward.3} parent=0 // pred_check_branch
    %23 = sbr.rel (0) target = $region25
  $region24: #{my_vgg_forward.3} parent=0 // pred_region
    _
  $region25: #{my_vgg_forward.3} parent=0 // pred_fallthru
    _
  // Predicated region
  $region26: #{my_vgg_forward.3} parent=0 // pred_check
    _
  $region27: #{my_vgg_forward.3} parent=0 // pred_check_branch
    %25 = sbr.rel (0) target = $region29
  $region28: #{my_vgg_forward.3} parent=0 // pred_region
    _
  $region29: #{my_vgg_forward.3} parent=0 // pred_fallthru
    _
  %v26 = vld [vmem:[%s0] sm:$0xff]
  %v27 = vld [vmem:[%s0 + $0x8] sm:$0xff]
  %v28 = vld [vmem:[%s1] sm:$0xf]
  %v29 = vld [vmem:[%s1 + $0x4] sm:$0xf]
  %v30 = vld [vmem:[%s1 + $0x8] sm:$0xf]
  %v31 = vld [vmem:[%s1 + $0xc] sm:$0xf]
  %v32 = vld [vmem:[%s1 + $0x10] sm:$0xf]
  %v33 = vld [vmem:[%s1 + $0x14] sm:$0xf]
  %v34 = vld [vmem:[%s1 + $0x18] sm:$0xf]
  %v35 = vld [vmem:[%s1 + $0x1c] sm:$0xf]
  %v36 = vld [vmem:[%s1 + $0x20] sm:$0xf]
  %v37 = vld [vmem:[%s1 + $0x24] sm:$0xf]
  %v38 = vld [vmem:[%s1 + $0x28] sm:$0xf]
  %v39 = vld [vmem:[%s1 + $0x2c] sm:$0xf]
  %v40 = vld [vmem:[%s1 + $0x30] sm:$0xf]
  %v41 = vld [vmem:[%s1 + $0x34] sm:$0xf]
  %v42 = vld [vmem:[%s1 + $0x38] sm:$0xf]
  %v43 = vld [vmem:[%s1 + $0x3c] sm:$0xf]
  %v44 = vld [vmem:[%s1 + $0x40] sm:$0xf]
  %v45 = vld [vmem:[%s1 + $0x44] sm:$0xf]
  %v46 = vld [vmem:[%s1 + $0x48] sm:$0xf]
  %v47 = vld [vmem:[%s1 + $0x4c] sm:$0xf]
  %v48 = vld [vmem:[%s1 + $0x50] sm:$0xf]
  %v49 = vld [vmem:[%s1 + $0x54] sm:$0xf]
  %v50 = vld [vmem:[%s1 + $0x58] sm:$0xf]
  %v51 = vld [vmem:[%s1 + $0x5c] sm:$0xf]
  %v52 = vld [vmem:[%s1 + $0x60] sm:$0xf]
  %v53 = vld [vmem:[%s1 + $0x64] sm:$0xf]
  %v54 = vld [vmem:[%s1 + $0x68] sm:$0xf]
  %v55 = vld [vmem:[%s1 + $0x6c] sm:$0xf]
  %v56 = vld [vmem:[%s1 + $0x70] sm:$0xf]
  %v57 = vld [vmem:[%s1 + $0x74] sm:$0xf]
  %v58 = vld [vmem:[%s1 + $0x78] sm:$0xf]
  %v59 = vld [vmem:[%s1 + $0x7c] sm:$0xf]
  %v60 = vld [vmem:[%s2] sm:$0x1]
  %v62 = vperm.slane %v60, 0
  %v66 = vunpack.c.l.b16 %v26
  %v67 = vunpack.c.h.b16 %v26
  %v68 = vunpack.c.l.b16 %v27
  %v69 = vunpack.c.h.b16 %v27
  %v70 = vpack.c.b16 %v68, %v66
  %v71 = vpack.c.b16 %v69, %v67
  %v106 = vunpack.c.l.b16 %v28
  %v107 = vunpack.c.l.b16 %v29
  %v108 = vunpack.c.l.b16 %v30
  %v109 = vunpack.c.l.b16 %v31
  %v110 = vunpack.c.l.b16 %v32
  %v111 = vunpack.c.l.b16 %v33
  %v112 = vunpack.c.l.b16 %v34
  %v113 = vunpack.c.l.b16 %v35
  %v114 = vunpack.c.l.b16 %v36
  %v115 = vunpack.c.l.b16 %v37
  %v116 = vunpack.c.l.b16 %v38
  %v117 = vunpack.c.l.b16 %v39
  %v118 = vunpack.c.l.b16 %v40
  %v119 = vunpack.c.l.b16 %v41
  %v120 = vunpack.c.l.b16 %v42
  %v121 = vunpack.c.l.b16 %v43
  %v122 = vunpack.c.l.b16 %v44
  %v123 = vunpack.c.l.b16 %v45
  %v124 = vunpack.c.l.b16 %v46
  %v125 = vunpack.c.l.b16 %v47
  %v126 = vunpack.c.l.b16 %v48
  %v127 = vunpack.c.l.b16 %v49
  %v128 = vunpack.c.l.b16 %v50
  %v129 = vunpack.c.l.b16 %v51
  %v130 = vunpack.c.l.b16 %v52
  %v131 = vunpack.c.l.b16 %v53
  %v132 = vunpack.c.l.b16 %v54
  %v133 = vunpack.c.l.b16 %v55
  %v134 = vunpack.c.l.b16 %v56
  %v135 = vunpack.c.l.b16 %v57
  %v136 = vunpack.c.l.b16 %v58
  %v137 = vunpack.c.l.b16 %v59
  %v138 = vpack.c.b16 %v107, %v106
  %v139 = vpack.c.b16 %v109, %v108
  %v140 = vpack.c.b16 %v111, %v110
  %v141 = vpack.c.b16 %v113, %v112
  %v142 = vpack.c.b16 %v115, %v114
  %v143 = vpack.c.b16 %v117, %v116
  %v144 = vpack.c.b16 %v119, %v118
  %v145 = vpack.c.b16 %v121, %v120
  %v146 = vpack.c.b16 %v123, %v122
  %v147 = vpack.c.b16 %v125, %v124
  %v148 = vpack.c.b16 %v127, %v126
  %v149 = vpack.c.b16 %v129, %v128
  %v150 = vpack.c.b16 %v131, %v130
  %v151 = vpack.c.b16 %v133, %v132
  %v152 = vpack.c.b16 %v135, %v134
  %v153 = vpack.c.b16 %v137, %v136
  %170 = vmatpush.bf16.msra.mxu0 %v145
  %171 = vmatpush.bf16.msra.mxu0 %v144
  %172 = vmatpush.bf16.msra.mxu0 %v143
  %173 = vmatpush.bf16.msra.mxu0 %v142
  %174 = vmatpush.bf16.msra.mxu0 %v141
  %175 = vmatpush.bf16.msra.mxu0 %v140
  %176 = vmatpush.bf16.msra.mxu0 %v139
  %177 = vmatpush.bf16.msra.mxu0 %v138
  %178 = vmatmul.bf16.gmra.mxu0 %v70
  %v179 = vpop.f32.mrf.mxu0
  %v180 = vadd.f32 %v62, %v179
  %v181 = vpop.f32.mrf.mxu0
  %v182 = vadd.f32 %v62, %v181
  %183 = vdwg.mxu0
  %184 = vmatpush.bf16.msra.mxu0 %v153
  %185 = vmatpush.bf16.msra.mxu0 %v152
  %186 = vmatpush.bf16.msra.mxu0 %v151
  %187 = vmatpush.bf16.msra.mxu0 %v150
  %188 = vmatpush.bf16.msra.mxu0 %v149
  %189 = vmatpush.bf16.msra.mxu0 %v148
  %190 = vmatpush.bf16.msra.mxu0 %v147
  %191 = vmatpush.bf16.msra.mxu0 %v146
  %192 = vmatmul.bf16.gmra.mxu0 %v71
  %v193 = vpop.f32.mrf.mxu0
  %v194 = vadd.f32 %v180, %v193
  %v195 = vpop.f32.mrf.mxu0
  %v196 = vadd.f32 %v182, %v195
  %197 = vdwg.mxu0
  %v198 = vmax.f32 %v194, 0.0
  %v199 = vmax.f32 %v196, 0.0
  %v200 = vpack.c.bf16 %v199, %v198
  %v201 = vld [vmem:[%s3] sm:$0xf]
  %v202 = vld [vmem:[%s3 + $0x4] sm:$0xf]
  %v203 = vld [vmem:[%s3 + $0x8] sm:$0xf]
  %v204 = vld [vmem:[%s3 + $0xc] sm:$0xf]
  %v205 = vld [vmem:[%s3 + $0x10] sm:$0xf]
  %v206 = vld [vmem:[%s3 + $0x14] sm:$0xf]
  %v207 = vld [vmem:[%s3 + $0x18] sm:$0xf]
  %v208 = vld [vmem:[%s3 + $0x1c] sm:$0xf]
  %v209 = vld [vmem:[%s3 + $0x20] sm:$0xf]
  %v210 = vld [vmem:[%s3 + $0x24] sm:$0xf]
  %v211 = vld [vmem:[%s3 + $0x28] sm:$0xf]
  %v212 = vld [vmem:[%s3 + $0x2c] sm:$0xf]
  %v213 = vld [vmem:[%s3 + $0x30] sm:$0xf]
  %v214 = vld [vmem:[%s3 + $0x34] sm:$0xf]
  %v215 = vld [vmem:[%s3 + $0x38] sm:$0xf]
  %v216 = vld [vmem:[%s3 + $0x3c] sm:$0xf]
  %v217 = vld [vmem:[%s4] sm:$0x1]
  %v219 = vperm.slane %v217, 0
  %v237 = vunpack.c.l.b16 %v201
  %v238 = vunpack.c.l.b16 %v202
  %v239 = vunpack.c.l.b16 %v203
  %v240 = vunpack.c.l.b16 %v204
  %v241 = vunpack.c.l.b16 %v205
  %v242 = vunpack.c.l.b16 %v206
  %v243 = vunpack.c.l.b16 %v207
  %v244 = vunpack.c.l.b16 %v208
  %v245 = vunpack.c.l.b16 %v209
  %v246 = vunpack.c.l.b16 %v210
  %v247 = vunpack.c.l.b16 %v211
  %v248 = vunpack.c.l.b16 %v212
  %v249 = vunpack.c.l.b16 %v213
  %v250 = vunpack.c.l.b16 %v214
  %v251 = vunpack.c.l.b16 %v215
  %v252 = vunpack.c.l.b16 %v216
  %v253 = vpack.c.b16 %v238, %v237
  %v254 = vpack.c.b16 %v240, %v239
  %v255 = vpack.c.b16 %v242, %v241
  %v256 = vpack.c.b16 %v244, %v243
  %v257 = vpack.c.b16 %v246, %v245
  %v258 = vpack.c.b16 %v248, %v247
  %v259 = vpack.c.b16 %v250, %v249
  %v260 = vpack.c.b16 %v252, %v251
  %269 = vmatpush.bf16.msra.mxu0 %v260
  %270 = vmatpush.bf16.msra.mxu0 %v259
  %271 = vmatpush.bf16.msra.mxu0 %v258
  %272 = vmatpush.bf16.msra.mxu0 %v257
  %273 = vmatpush.bf16.msra.mxu0 %v256
  %274 = vmatpush.bf16.msra.mxu0 %v255
  %275 = vmatpush.bf16.msra.mxu0 %v254
  %276 = vmatpush.bf16.msra.mxu0 %v253
  %277 = vmatmul.bf16.gmra.mxu0 %v200
  %v278 = vpop.f32.mrf.mxu0
  %v279 = vadd.f32 %v219, %v278
  %v280 = vpop.f32.mrf.mxu0
  %v281 = vadd.f32 %v219, %v280
  %282 = vdwg.mxu0
  %v283 = vmax.f32 %v279, 0.0
  %v284 = vmax.f32 %v281, 0.0
  %v285 = vpack.c.bf16 %v284, %v283
  %v286 = vld [vmem:[%s5] sm:$0xf]
  %v287 = vld [vmem:[%s5 + $0x4] sm:$0xf]
  %v288 = vld [vmem:[%s5 + $0x8] sm:$0xf]
  %v289 = vld [vmem:[%s5 + $0xc] sm:$0xf]
  %v290 = vld [vmem:[%s5 + $0x10] sm:$0xf]
  %v291 = vld [vmem:[%s5 + $0x14] sm:$0xf]
  %v292 = vld [vmem:[%s5 + $0x18] sm:$0xf]
  %v293 = vld [vmem:[%s5 + $0x1c] sm:$0xf]
  %v294 = vld [vmem:[%s5 + $0x20] sm:$0xf]
  %v295 = vld [vmem:[%s5 + $0x24] sm:$0xf]
  %v296 = vld [vmem:[%s5 + $0x28] sm:$0xf]
  %v297 = vld [vmem:[%s5 + $0x2c] sm:$0xf]
  %v298 = vld [vmem:[%s5 + $0x30] sm:$0xf]
  %v299 = vld [vmem:[%s5 + $0x34] sm:$0xf]
  %v300 = vld [vmem:[%s5 + $0x38] sm:$0xf]
  %v301 = vld [vmem:[%s5 + $0x3c] sm:$0xf]
  %v302 = vld [vmem:[%s6] sm:$0x1]
  %v304 = vperm.slane %v302, 0
  %v322 = vunpack.c.l.b16 %v286
  %v323 = vunpack.c.l.b16 %v287
  %v324 = vunpack.c.l.b16 %v288
  %v325 = vunpack.c.l.b16 %v289
  %v326 = vunpack.c.l.b16 %v290
  %v327 = vunpack.c.l.b16 %v291
  %v328 = vunpack.c.l.b16 %v292
  %v329 = vunpack.c.l.b16 %v293
  %v330 = vunpack.c.l.b16 %v294
  %v331 = vunpack.c.l.b16 %v295
  %v332 = vunpack.c.l.b16 %v296
  %v333 = vunpack.c.l.b16 %v297
  %v334 = vunpack.c.l.b16 %v298
  %v335 = vunpack.c.l.b16 %v299
  %v336 = vunpack.c.l.b16 %v300
  %v337 = vunpack.c.l.b16 %v301
  %v338 = vpack.c.b16 %v323, %v322
  %v339 = vpack.c.b16 %v325, %v324
  %v340 = vpack.c.b16 %v327, %v326
  %v341 = vpack.c.b16 %v329, %v328
  %v342 = vpack.c.b16 %v331, %v330
  %v343 = vpack.c.b16 %v333, %v332
  %v344 = vpack.c.b16 %v335, %v334
  %v345 = vpack.c.b16 %v337, %v336
  %354 = vmatpush.bf16.msra.mxu0 %v345
  %355 = vmatpush.bf16.msra.mxu0 %v344
  %356 = vmatpush.bf16.msra.mxu0 %v343
  %357 = vmatpush.bf16.msra.mxu0 %v342
  %358 = vmatpush.bf16.msra.mxu0 %v341
  %359 = vmatpush.bf16.msra.mxu0 %v340
  %360 = vmatpush.bf16.msra.mxu0 %v339
  %361 = vmatpush.bf16.msra.mxu0 %v338
  %362 = vmatmul.bf16.gmra.mxu0 %v285
  %v363 = vpop.f32.mrf.mxu0
  %v364 = vadd.f32 %v304, %v363
  %v365 = vpop.f32.mrf.mxu0
  %v366 = vadd.f32 %v304, %v365
  %367 = vdwg.mxu0
  %368 = vmax.xlane.f32.xlu0 %v364
  %v369 = vpop.xlane.xlu0 %368
  %370 = vmax.xlane.f32.xlu0 %v366
  %v371 = vpop.xlane.xlu0 %370
  %v372 = vsub.f32 %v364, %v369
  %v373 = vsub.f32 %v366, %v371
  %v374 = vmul.f32 %v372, 1.442695
  %v375 = vpow.pop %v374
  %v376 = vmul.f32 %v373, 1.442695
  %v377 = vpow.pop %v376
  %378 = vadd.xlane.f32.xlu0 %v375
  %v379 = vpop.xlane.xlu0 %378
  %380 = vadd.xlane.f32.xlu0 %v377
  %v381 = vpop.xlane.xlu0 %380
  %v382 = vlog2.pop %v379
  %v383 = vmul.f32 %v382, 0.6931472
  %v384 = vlog2.pop %v381
  %v385 = vmul.f32 %v384, 0.6931472
  %v386 = vsub.f32 %v372, %v383
  %v387 = vsub.f32 %v373, %v385
  %388 = vst [vmem:[%s7] sm:$0xff] %v386
  %389 = vst [vmem:[%s7 + $0x8] sm:$0xff] %v387
  // Predicated region
  $region30: #{my_vgg_forward.3} parent=0 // pred_check
    _
  $region31: #{my_vgg_forward.3} parent=0 // pred_check_branch
    %391 = sbr.rel (0) target = $region33
  $region32: #{my_vgg_forward.3} parent=0 // pred_region
    _
  $region33: #{my_vgg_forward.3} parent=0 // pred_fallthru
    _
  // Predicated region
  $region34: #{my_vgg_forward.3} parent=0 // pred_check
    _
  $region35: #{my_vgg_forward.3} parent=0 // pred_check_branch
    %393 = sbr.rel (0) target = $region37
  $region36: #{my_vgg_forward.3} parent=0 // pred_region
    _
  $region37: #{my_vgg_forward.3} parent=0 // pred_fallthru
    _

// kernel: my_vgg_forward.2
$region0: #{my_vgg_forward.2}
  #allocation0 [shape = 'u32[]', space=smem, size = 0x4, offset = 0x4, fixed_abs, tag = 'smem constant byte address 0x4 - core index']
  #allocation1 [shape = 'u32[72,128]{1,0:T(1,128)}', space=vmem, size = 0x9000, scoped, tag = 'internal scratch']
  #allocation2 [shape = 'f32[16,256]{1,0:T(8,128)}', space=vmem, size = 0x4000, scoped, tag = 'scratch operand']
  %s0 = inlined_call_operand.vmem [shape: bf16[16,512], index: 0, kind: input, shape index: {}]
  %s1 = inlined_call_operand.hbm [shape: bf16[512,256], index: 1, kind: input, shape index: {}]
  %s2 = inlined_call_operand.vmem [shape: f32[1,256], index: 2, kind: input, shape index: {}]
  %s3 = inlined_call_operand.vmem [shape: bf16[16,256], index: 3, kind: output, shape index: {}]
  %s4 = sld [smem:[#allocation0]]
  $region34: #{my_vgg_forward.2} parent=0
    _
  %s6 = ssub.s32 1, %s4
  %s7 = scalar_select 0, %s6, %s4
  $region1: #{my_vgg_forward.2} parent=0
    #allocation3 [shape = 'u8[262144]{0}', space=vmem, size = 0x40000, scoped, tag = 'input window, operand 1, single buffered']
    #allocation4 [shape = 's32[1]{0}', space=sflag, size = 0x4, scoped, tag = 'scoped memory for my_vgg_forward.2']
    %8 = vsyncpa [#allocation4], 0
    // Predicated region
    $region2: #{my_vgg_forward.2} parent=1 // pred_check
      _
    $region3: #{my_vgg_forward.2} parent=1 // pred_check_branch
      %10 = sbr.rel (0) target = $region5
    $region4: #{my_vgg_forward.2} parent=1 // pred_region
      _
    $region5: #{my_vgg_forward.2} parent=1 // pred_fallthru
      _
    // Predicated region
    $region6: #{my_vgg_forward.2} parent=1 // pred_check
      _
    $region7: #{my_vgg_forward.2} parent=1 // pred_check_branch
      %12 = sbr.rel (0) target = $region9
    $region8: #{my_vgg_forward.2} parent=1 // pred_region
      %14 = vsyncadd [#allocation4], 0
      %s15 = sshll.u32 %s1, 4
      %s16 = int_to_ptr.hbm [resolvable:$true] %s15
      %s17 = sshll.u32 [#allocation3], 4
      %s18 = int_to_ptr.vmem [resolvable:$true] %s17
      %23 = dma.hbm_to_vmem [thread:$0]  %s16, 8192, %s18, [#allocation4], 128, 128, 8
    $region9: #{my_vgg_forward.2} parent=1 // pred_fallthru
      _
    // Predicated region
    $region10: #{my_vgg_forward.2} parent=1 // pred_check
      _
    $region11: #{my_vgg_forward.2} parent=1 // pred_check_branch
      %25 = sbr.rel (0) target = $region13
    $region12: #{my_vgg_forward.2} parent=1 // pred_region
      _
    $region13: #{my_vgg_forward.2} parent=1 // pred_fallthru
      _
    // Predicated region
    $region14: #{my_vgg_forward.2} parent=1 // pred_check
      _
    $region15: #{my_vgg_forward.2} parent=1 // pred_check_branch
      %27 = sbr.rel (0) target = $region17
    $region16: #{my_vgg_forward.2} parent=1 // pred_region
      %29 = dma.done [#allocation4], 8192
    $region17: #{my_vgg_forward.2} parent=1 // pred_fallthru
      _
    %p30 = scmp.eq.s32.totalorder 0, 0
    // Predicated region
    $region18: #{my_vgg_forward.2} parent=1 // pred_check
      %p31 = pneg %p30
    $region19: #{my_vgg_forward.2} parent=1 // pred_check_branch
      %33 = sbr.rel (%p31) target = $region21
    $region20: #{my_vgg_forward.2} parent=1 // pred_region
      %34 = vst [vmem:[#allocation2] sm:$0xff] 0.0
      %35 = vst [vmem:[#allocation2 + $0x8] sm:$0xff] 0.0
      %36 = vst [vmem:[#allocation2 + $0x10] sm:$0xff] 0.0
      %37 = vst [vmem:[#allocation2 + $0x18] sm:$0xff] 0.0
    $region21: #{my_vgg_forward.2} parent=1 // pred_fallthru
      _
    %v38 = vld [vmem:[#allocation2] sm:$0xff]
    %v39 = vld [vmem:[#allocation2 + $0x8] sm:$0xff]
    %v40 = vld [vmem:[#allocation2 + $0x10] sm:$0xff]
    %v41 = vld [vmem:[#allocation2 + $0x18] sm:$0xff]
    %v42 = vld [vmem:[%s0] sm:$0xff]
    %v43 = vld [vmem:[%s0 + $0x8] sm:$0xff]
    %v44 = vld [vmem:[%s0 + $0x10] sm:$0xff]
    %v45 = vld [vmem:[%s0 + $0x18] sm:$0xff]
    %v46 = vld [vmem:[#allocation3] sm:$0xff]
    %v47 = vld [vmem:[#allocation3 + $0x8] sm:$0xff]
    %v48 = vld [vmem:[#allocation3 + $0x10] sm:$0xff]
    %v49 = vld [vmem:[#allocation3 + $0x18] sm:$0xff]
    %v50 = vld [vmem:[#allocation3 + $0x20] sm:$0xff]
    %v51 = vld [vmem:[#allocation3 + $0x28] sm:$0xff]
    %v52 = vld [vmem:[#allocation3 + $0x30] sm:$0xff]
    %v53 = vld [vmem:[#allocation3 + $0x38] sm:$0xff]
    %v54 = vld [vmem:[#allocation3 + $0x40] sm:$0xff]
    %v55 = vld [vmem:[#allocation3 + $0x48] sm:$0xff]
    %v56 = vld [vmem:[#allocation3 + $0x50] sm:$0xff]
    %v57 = vld [vmem:[#allocation3 + $0x58] sm:$0xff]
    %v58 = vld [vmem:[#allocation3 + $0x60] sm:$0xff]
    %v59 = vld [vmem:[#allocation3 + $0x68] sm:$0xff]
    %v60 = vld [vmem:[#allocation3 + $0x70] sm:$0xff]
    %v61 = vld [vmem:[#allocation3 + $0x78] sm:$0xff]
    %v62 = vld [vmem:[#allocation3 + $0x80] sm:$0xff]
    %v63 = vld [vmem:[#allocation3 + $0x88] sm:$0xff]
    %v64 = vld [vmem:[#allocation3 + $0x90] sm:$0xff]
    %v65 = vld [vmem:[#allocation3 + $0x98] sm:$0xff]
    %v66 = vld [vmem:[#allocation3 + $0xa0] sm:$0xff]
    %v67 = vld [vmem:[#allocation3 + $0xa8] sm:$0xff]
    %v68 = vld [vmem:[#allocation3 + $0xb0] sm:$0xff]
    %v69 = vld [vmem:[#allocation3 + $0xb8] sm:$0xff]
    %v70 = vld [vmem:[#allocation3 + $0xc0] sm:$0xff]
    %v71 = vld [vmem:[#allocation3 + $0xc8] sm:$0xff]
    %v72 = vld [vmem:[#allocation3 + $0xd0] sm:$0xff]
    %v73 = vld [vmem:[#allocation3 + $0xd8] sm:$0xff]
    %v74 = vld [vmem:[#allocation3 + $0xe0] sm:$0xff]
    %v75 = vld [vmem:[#allocation3 + $0xe8] sm:$0xff]
    %v76 = vld [vmem:[#allocation3 + $0xf0] sm:$0xff]
    %v77 = vld [vmem:[#allocation3 + $0xf8] sm:$0xff]
    %v78 = vld [vmem:[#allocation3 + $0x100] sm:$0xff]
    %v79 = vld [vmem:[#allocation3 + $0x108] sm:$0xff]
    %v80 = vld [vmem:[#allocation3 + $0x110] sm:$0xff]
    %v81 = vld [vmem:[#allocation3 + $0x118] sm:$0xff]
    %v82 = vld [vmem:[#allocation3 + $0x120] sm:$0xff]
    %v83 = vld [vmem:[#allocation3 + $0x128] sm:$0xff]
    %v84 = vld [vmem:[#allocation3 + $0x130] sm:$0xff]
    %v85 = vld [vmem:[#allocation3 + $0x138] sm:$0xff]
    %v86 = vld [vmem:[#allocation3 + $0x140] sm:$0xff]
    %v87 = vld [vmem:[#allocation3 + $0x148] sm:$0xff]
    %v88 = vld [vmem:[#allocation3 + $0x150] sm:$0xff]
    %v89 = vld [vmem:[#allocation3 + $0x158] sm:$0xff]
    %v90 = vld [vmem:[#allocation3 + $0x160] sm:$0xff]
    %v91 = vld [vmem:[#allocation3 + $0x168] sm:$0xff]
    %v92 = vld [vmem:[#allocation3 + $0x170] sm:$0xff]
    %v93 = vld [vmem:[#allocation3 + $0x178] sm:$0xff]
    %v94 = vld [vmem:[#allocation3 + $0x180] sm:$0xff]
    %v95 = vld [vmem:[#allocation3 + $0x188] sm:$0xff]
    %v96 = vld [vmem:[#allocation3 + $0x190] sm:$0xff]
    %v97 = vld [vmem:[#allocation3 + $0x198] sm:$0xff]
    %v98 = vld [vmem:[#allocation3 + $0x1a0] sm:$0xff]
    %v99 = vld [vmem:[#allocation3 + $0x1a8] sm:$0xff]
    %v100 = vld [vmem:[#allocation3 + $0x1b0] sm:$0xff]
    %v101 = vld [vmem:[#allocation3 + $0x1b8] sm:$0xff]
    %v102 = vld [vmem:[#allocation3 + $0x1c0] sm:$0xff]
    %v103 = vld [vmem:[#allocation3 + $0x1c8] sm:$0xff]
    %v104 = vld [vmem:[#allocation3 + $0x1d0] sm:$0xff]
    %v105 = vld [vmem:[#allocation3 + $0x1d8] sm:$0xff]
    %v106 = vld [vmem:[#allocation3 + $0x1e0] sm:$0xff]
    %v107 = vld [vmem:[#allocation3 + $0x1e8] sm:$0xff]
    %v108 = vld [vmem:[#allocation3 + $0x1f0] sm:$0xff]
    %v109 = vld [vmem:[#allocation3 + $0x1f8] sm:$0xff]
    %v114 = vunpack.c.l.b16 %v42
    %v115 = vunpack.c.h.b16 %v42
    %v116 = vunpack.c.l.b16 %v43
    %v117 = vunpack.c.h.b16 %v43
    %v118 = vunpack.c.l.b16 %v44
    %v119 = vunpack.c.h.b16 %v44
    %v120 = vunpack.c.l.b16 %v45
    %v121 = vunpack.c.h.b16 %v45
    %v122 = vpack.c.b16 %v118, %v114
    %v123 = vpack.c.b16 %v119, %v115
    %v124 = vpack.c.b16 %v120, %v116
    %v125 = vpack.c.b16 %v121, %v117
    %v194 = vunpack.c.l.b16 %v46
    %v195 = vunpack.c.h.b16 %v46
    %v196 = vunpack.c.l.b16 %v47
    %v197 = vunpack.c.h.b16 %v47
    %v198 = vunpack.c.l.b16 %v48
    %v199 = vunpack.c.h.b16 %v48
    %v200 = vunpack.c.l.b16 %v49
    %v201 = vunpack.c.h.b16 %v49
    %v202 = vunpack.c.l.b16 %v50
    %v203 = vunpack.c.h.b16 %v50
    %v204 = vunpack.c.l.b16 %v51
    %v205 = vunpack.c.h.b16 %v51
    %v206 = vunpack.c.l.b16 %v52
    %v207 = vunpack.c.h.b16 %v52
    %v208 = vunpack.c.l.b16 %v53
    %v209 = vunpack.c.h.b16 %v53
    %v210 = vunpack.c.l.b16 %v54
    %v211 = vunpack.c.h.b16 %v54
    %v212 = vunpack.c.l.b16 %v55
    %v213 = vunpack.c.h.b16 %v55
    %v214 = vunpack.c.l.b16 %v56
    %v215 = vunpack.c.h.b16 %v56
    %v216 = vunpack.c.l.b16 %v57
    %v217 = vunpack.c.h.b16 %v57
    %v218 = vunpack.c.l.b16 %v58
    %v219 = vunpack.c.h.b16 %v58
    %v220 = vunpack.c.l.b16 %v59
    %v221 = vunpack.c.h.b16 %v59
    %v222 = vunpack.c.l.b16 %v60
    %v223 = vunpack.c.h.b16 %v60
    %v224 = vunpack.c.l.b16 %v61
    %v225 = vunpack.c.h.b16 %v61
    %v226 = vunpack.c.l.b16 %v62
    %v227 = vunpack.c.h.b16 %v62
    %v228 = vunpack.c.l.b16 %v63
    %v229 = vunpack.c.h.b16 %v63
    %v230 = vunpack.c.l.b16 %v64
    %v231 = vunpack.c.h.b16 %v64
    %v232 = vunpack.c.l.b16 %v65
    %v233 = vunpack.c.h.b16 %v65
    %v234 = vunpack.c.l.b16 %v66
    %v235 = vunpack.c.h.b16 %v66
    %v236 = vunpack.c.l.b16 %v67
    %v237 = vunpack.c.h.b16 %v67
    %v238 = vunpack.c.l.b16 %v68
    %v239 = vunpack.c.h.b16 %v68
    %v240 = vunpack.c.l.b16 %v69
    %v241 = vunpack.c.h.b16 %v69
    %v242 = vunpack.c.l.b16 %v70
    %v243 = vunpack.c.h.b16 %v70
    %v244 = vunpack.c.l.b16 %v71
    %v245 = vunpack.c.h.b16 %v71
    %v246 = vunpack.c.l.b16 %v72
    %v247 = vunpack.c.h.b16 %v72
    %v248 = vunpack.c.l.b16 %v73
    %v249 = vunpack.c.h.b16 %v73
    %v250 = vunpack.c.l.b16 %v74
    %v251 = vunpack.c.h.b16 %v74
    %v252 = vunpack.c.l.b16 %v75
    %v253 = vunpack.c.h.b16 %v75
    %v254 = vunpack.c.l.b16 %v76
    %v255 = vunpack.c.h.b16 %v76
    %v256 = vunpack.c.l.b16 %v77
    %v257 = vunpack.c.h.b16 %v77
    %v258 = vunpack.c.l.b16 %v78
    %v259 = vunpack.c.h.b16 %v78
    %v260 = vunpack.c.l.b16 %v79
    %v261 = vunpack.c.h.b16 %v79
    %v262 = vunpack.c.l.b16 %v80
    %v263 = vunpack.c.h.b16 %v80
    %v264 = vunpack.c.l.b16 %v81
    %v265 = vunpack.c.h.b16 %v81
    %v266 = vunpack.c.l.b16 %v82
    %v267 = vunpack.c.h.b16 %v82
    %v268 = vunpack.c.l.b16 %v83
    %v269 = vunpack.c.h.b16 %v83
    %v270 = vunpack.c.l.b16 %v84
    %v271 = vunpack.c.h.b16 %v84
    %v272 = vunpack.c.l.b16 %v85
    %v273 = vunpack.c.h.b16 %v85
    %v274 = vunpack.c.l.b16 %v86
    %v275 = vunpack.c.h.b16 %v86
    %v276 = vunpack.c.l.b16 %v87
    %v277 = vunpack.c.h.b16 %v87
    %v278 = vunpack.c.l.b16 %v88
    %v279 = vunpack.c.h.b16 %v88
    %v280 = vunpack.c.l.b16 %v89
    %v281 = vunpack.c.h.b16 %v89
    %v282 = vunpack.c.l.b16 %v90
    %v283 = vunpack.c.h.b16 %v90
    %v284 = vunpack.c.l.b16 %v91
    %v285 = vunpack.c.h.b16 %v91
    %v286 = vunpack.c.l.b16 %v92
    %v287 = vunpack.c.h.b16 %v92
    %v288 = vunpack.c.l.b16 %v93
    %v289 = vunpack.c.h.b16 %v93
    %v290 = vunpack.c.l.b16 %v94
    %v291 = vunpack.c.h.b16 %v94
    %v292 = vunpack.c.l.b16 %v95
    %v293 = vunpack.c.h.b16 %v95
    %v294 = vunpack.c.l.b16 %v96
    %v295 = vunpack.c.h.b16 %v96
    %v296 = vunpack.c.l.b16 %v97
    %v297 = vunpack.c.h.b16 %v97
    %v298 = vunpack.c.l.b16 %v98
    %v299 = vunpack.c.h.b16 %v98
    %v300 = vunpack.c.l.b16 %v99
    %v301 = vunpack.c.h.b16 %v99
    %v302 = vunpack.c.l.b16 %v100
    %v303 = vunpack.c.h.b16 %v100
    %v304 = vunpack.c.l.b16 %v101
    %v305 = vunpack.c.h.b16 %v101
    %v306 = vunpack.c.l.b16 %v102
    %v307 = vunpack.c.h.b16 %v102
    %v308 = vunpack.c.l.b16 %v103
    %v309 = vunpack.c.h.b16 %v103
    %v310 = vunpack.c.l.b16 %v104
    %v311 = vunpack.c.h.b16 %v104
    %v312 = vunpack.c.l.b16 %v105
    %v313 = vunpack.c.h.b16 %v105
    %v314 = vunpack.c.l.b16 %v106
    %v315 = vunpack.c.h.b16 %v106
    %v316 = vunpack.c.l.b16 %v107
    %v317 = vunpack.c.h.b16 %v107
    %v318 = vunpack.c.l.b16 %v108
    %v319 = vunpack.c.h.b16 %v108
    %v320 = vunpack.c.l.b16 %v109
    %v321 = vunpack.c.h.b16 %v109
    %v322 = vpack.c.b16 %v196, %v194
    %v323 = vpack.c.b16 %v197, %v195
    %v324 = vpack.c.b16 %v200, %v198
    %v325 = vpack.c.b16 %v201, %v199
    %v326 = vpack.c.b16 %v204, %v202
    %v327 = vpack.c.b16 %v205, %v203
    %v328 = vpack.c.b16 %v208, %v206
    %v329 = vpack.c.b16 %v209, %v207
    %v330 = vpack.c.b16 %v212, %v210
    %v331 = vpack.c.b16 %v213, %v211
    %v332 = vpack.c.b16 %v216, %v214
    %v333 = vpack.c.b16 %v217, %v215
    %v334 = vpack.c.b16 %v220, %v218
    %v335 = vpack.c.b16 %v221, %v219
    %v336 = vpack.c.b16 %v224, %v222
    %v337 = vpack.c.b16 %v225, %v223
    %v338 = vpack.c.b16 %v228, %v226
    %v339 = vpack.c.b16 %v229, %v227
    %v340 = vpack.c.b16 %v232, %v230
    %v341 = vpack.c.b16 %v233, %v231
    %v342 = vpack.c.b16 %v236, %v234
    %v343 = vpack.c.b16 %v237, %v235
    %v344 = vpack.c.b16 %v240, %v238
    %v345 = vpack.c.b16 %v241, %v239
    %v346 = vpack.c.b16 %v244, %v242
    %v347 = vpack.c.b16 %v245, %v243
    %v348 = vpack.c.b16 %v248, %v246
    %v349 = vpack.c.b16 %v249, %v247
    %v350 = vpack.c.b16 %v252, %v250
    %v351 = vpack.c.b16 %v253, %v251
    %v352 = vpack.c.b16 %v256, %v254
    %v353 = vpack.c.b16 %v257, %v255
    %v354 = vpack.c.b16 %v260, %v258
    %v355 = vpack.c.b16 %v261, %v259
    %v356 = vpack.c.b16 %v264, %v262
    %v357 = vpack.c.b16 %v265, %v263
    %v358 = vpack.c.b16 %v268, %v266
    %v359 = vpack.c.b16 %v269, %v267
    %v360 = vpack.c.b16 %v272, %v270
    %v361 = vpack.c.b16 %v273, %v271
    %v362 = vpack.c.b16 %v276, %v274
    %v363 = vpack.c.b16 %v277, %v275
    %v364 = vpack.c.b16 %v280, %v278
    %v365 = vpack.c.b16 %v281, %v279
    %v366 = vpack.c.b16 %v284, %v282
    %v367 = vpack.c.b16 %v285, %v283
    %v368 = vpack.c.b16 %v288, %v286
    %v369 = vpack.c.b16 %v289, %v287
    %v370 = vpack.c.b16 %v292, %v290
    %v371 = vpack.c.b16 %v293, %v291
    %v372 = vpack.c.b16 %v296, %v294
    %v373 = vpack.c.b16 %v297, %v295
    %v374 = vpack.c.b16 %v300, %v298
    %v375 = vpack.c.b16 %v301, %v299
    %v376 = vpack.c.b16 %v304, %v302
    %v377 = vpack.c.b16 %v305, %v303
    %v378 = vpack.c.b16 %v308, %v306
    %v379 = vpack.c.b16 %v309, %v307
    %v380 = vpack.c.b16 %v312, %v310
    %v381 = vpack.c.b16 %v313, %v311
    %v382 = vpack.c.b16 %v316, %v314
    %v383 = vpack.c.b16 %v317, %v315
    %v384 = vpack.c.b16 %v320, %v318
    %v385 = vpack.c.b16 %v321, %v319
    %450 = vmatpush.bf16.msra.mxu0 %v336
    %451 = vmatpush.bf16.msra.mxu0 %v334
    %452 = vmatpush.bf16.msra.mxu0 %v332
    %453 = vmatpush.bf16.msra.mxu0 %v330
    %454 = vmatpush.bf16.msra.mxu0 %v328
    %455 = vmatpush.bf16.msra.mxu0 %v326
    %456 = vmatpush.bf16.msra.mxu0 %v324
    %457 = vmatpush.bf16.msra.mxu0 %v322
    %458 = vmatmul.bf16.gmra.mxu0 %v122
    %v459 = vpop.f32.mrf.mxu0
    %v460 = vadd.f32 0.0, %v459
    %v461 = vpop.f32.mrf.mxu0
    %v462 = vadd.f32 0.0, %v461
    %463 = vdwg.mxu0
    %464 = vmatpush.bf16.msra.mxu0 %v352
    %465 = vmatpush.bf16.msra.mxu0 %v350
    %466 = vmatpush.bf16.msra.mxu0 %v348
    %467 = vmatpush.bf16.msra.mxu0 %v346
    %468 = vmatpush.bf16.msra.mxu0 %v344
    %469 = vmatpush.bf16.msra.mxu0 %v342
    %470 = vmatpush.bf16.msra.mxu0 %v340
    %471 = vmatpush.bf16.msra.mxu0 %v338
    %472 = vmatmul.bf16.gmra.mxu0 %v123
    %v473 = vpop.f32.mrf.mxu0
    %v474 = vadd.f32 %v460, %v473
    %v475 = vpop.f32.mrf.mxu0
    %v476 = vadd.f32 %v462, %v475
    %477 = vdwg.mxu0
    %478 = vmatpush.bf16.msra.mxu0 %v368
    %479 = vmatpush.bf16.msra.mxu0 %v366
    %480 = vmatpush.bf16.msra.mxu0 %v364
    %481 = vmatpush.bf16.msra.mxu0 %v362
    %482 = vmatpush.bf16.msra.mxu0 %v360
    %483 = vmatpush.bf16.msra.mxu0 %v358
    %484 = vmatpush.bf16.msra.mxu0 %v356
    %485 = vmatpush.bf16.msra.mxu0 %v354
    %486 = vmatmul.bf16.gmra.mxu0 %v124
    %v487 = vpop.f32.mrf.mxu0
    %v488 = vadd.f32 %v474, %v487
    %v489 = vpop.f32.mrf.mxu0
    %v490 = vadd.f32 %v476, %v489
    %491 = vdwg.mxu0
    %492 = vmatpush.bf16.msra.mxu0 %v384
    %493 = vmatpush.bf16.msra.mxu0 %v382
    %494 = vmatpush.bf16.msra.mxu0 %v380
    %495 = vmatpush.bf16.msra.mxu0 %v378
    %496 = vmatpush.bf16.msra.mxu0 %v376
    %497 = vmatpush.bf16.msra.mxu0 %v374
    %498 = vmatpush.bf16.msra.mxu0 %v372
    %499 = vmatpush.bf16.msra.mxu0 %v370
    %500 = vmatmul.bf16.gmra.mxu0 %v125
    %v501 = vpop.f32.mrf.mxu0
    %v502 = vadd.f32 %v488, %v501
    %v503 = vpop.f32.mrf.mxu0
    %v504 = vadd.f32 %v490, %v503
    %505 = vdwg.mxu0
    %506 = vmatpush.bf16.msra.mxu0 %v337
    %507 = vmatpush.bf16.msra.mxu0 %v335
    %508 = vmatpush.bf16.msra.mxu0 %v333
    %509 = vmatpush.bf16.msra.mxu0 %v331
    %510 = vmatpush.bf16.msra.mxu0 %v329
    %511 = vmatpush.bf16.msra.mxu0 %v327
    %512 = vmatpush.bf16.msra.mxu0 %v325
    %513 = vmatpush.bf16.msra.mxu0 %v323
    %514 = vmatmul.bf16.gmra.mxu0 %v122
    %v515 = vpop.f32.mrf.mxu0
    %v516 = vadd.f32 0.0, %v515
    %v517 = vpop.f32.mrf.mxu0
    %v518 = vadd.f32 0.0, %v517
    %519 = vdwg.mxu0
    %520 = vmatpush.bf16.msra.mxu0 %v353
    %521 = vmatpush.bf16.msra.mxu0 %v351
    %522 = vmatpush.bf16.msra.mxu0 %v349
    %523 = vmatpush.bf16.msra.mxu0 %v347
    %524 = vmatpush.bf16.msra.mxu0 %v345
    %525 = vmatpush.bf16.msra.mxu0 %v343
    %526 = vmatpush.bf16.msra.mxu0 %v341
    %527 = vmatpush.bf16.msra.mxu0 %v339
    %528 = vmatmul.bf16.gmra.mxu0 %v123
    %v529 = vpop.f32.mrf.mxu0
    %v530 = vadd.f32 %v516, %v529
    %v531 = vpop.f32.mrf.mxu0
    %v532 = vadd.f32 %v518, %v531
    %533 = vdwg.mxu0
    %534 = vmatpush.bf16.msra.mxu0 %v369
    %535 = vmatpush.bf16.msra.mxu0 %v367
    %536 = vmatpush.bf16.msra.mxu0 %v365
    %537 = vmatpush.bf16.msra.mxu0 %v363
    %538 = vmatpush.bf16.msra.mxu0 %v361
    %539 = vmatpush.bf16.msra.mxu0 %v359
    %540 = vmatpush.bf16.msra.mxu0 %v357
    %541 = vmatpush.bf16.msra.mxu0 %v355
    %542 = vmatmul.bf16.gmra.mxu0 %v124
    %v543 = vpop.f32.mrf.mxu0
    %v544 = vadd.f32 %v530, %v543
    %v545 = vpop.f32.mrf.mxu0
    %v546 = vadd.f32 %v532, %v545
    %547 = vdwg.mxu0
    %548 = vmatpush.bf16.msra.mxu0 %v385
    %549 = vmatpush.bf16.msra.mxu0 %v383
    %550 = vmatpush.bf16.msra.mxu0 %v381
    %551 = vmatpush.bf16.msra.mxu0 %v379
    %552 = vmatpush.bf16.msra.mxu0 %v377
    %553 = vmatpush.bf16.msra.mxu0 %v375
    %554 = vmatpush.bf16.msra.mxu0 %v373
    %555 = vmatpush.bf16.msra.mxu0 %v371
    %556 = vmatmul.bf16.gmra.mxu0 %v125
    %v557 = vpop.f32.mrf.mxu0
    %v558 = vadd.f32 %v544, %v557
    %v559 = vpop.f32.mrf.mxu0
    %v560 = vadd.f32 %v546, %v559
    %561 = vdwg.mxu0
    %v562 = vadd.f32 %v38, %v502
    %v563 = vadd.f32 %v39, %v558
    %v564 = vadd.f32 %v40, %v504
    %v565 = vadd.f32 %v41, %v560
    %566 = vst [vmem:[#allocation2] sm:$0xff] %v562
    %567 = vst [vmem:[#allocation2 + $0x8] sm:$0xff] %v563
    %568 = vst [vmem:[#allocation2 + $0x10] sm:$0xff] %v564
    %569 = vst [vmem:[#allocation2 + $0x18] sm:$0xff] %v565
    // Predicated region
    $region22: #{my_vgg_forward.2} parent=1 // pred_check
      %p570 = pneg %p30
    $region23: #{my_vgg_forward.2} parent=1 // pred_check_branch
      %572 = sbr.rel (%p570) target = $region25
    $region24: #{my_vgg_forward.2} parent=1 // pred_region
      %v573 = vld [vmem:[#allocation2] sm:$0xff]
      %v574 = vld [vmem:[#allocation2 + $0x8] sm:$0xff]
      %v575 = vld [vmem:[#allocation2 + $0x10] sm:$0xff]
      %v576 = vld [vmem:[#allocation2 + $0x18] sm:$0xff]
      %v577 = vld [vmem:[%s2] sm:$0x3]
      %v579 = vperm.slane %v577, 0
      %v580 = vperm.slane %v577, 1
      %v583 = vadd.f32 %v573, %v579
      %v584 = vadd.f32 %v574, %v580
      %v585 = vadd.f32 %v575, %v579
      %v586 = vadd.f32 %v576, %v580
      %v587 = vmax.f32 %v583, 0.0
      %v588 = vmax.f32 %v584, 0.0
      %v589 = vmax.f32 %v585, 0.0
      %v590 = vmax.f32 %v586, 0.0
      %v591 = vpack.c.bf16 %v588, %v587
      %v592 = vpack.c.bf16 %v590, %v589
      %593 = vst [vmem:[%s3] sm:$0xff] %v591
      %594 = vst [vmem:[%s3 + $0x8] sm:$0xff] %v592
    $region25: #{my_vgg_forward.2} parent=1 // pred_fallthru
      _
    // Predicated region
    $region26: #{my_vgg_forward.2} parent=1 // pred_check
      _
    $region27: #{my_vgg_forward.2} parent=1 // pred_check_branch
      %596 = sbr.rel (0) target = $region29
    $region28: #{my_vgg_forward.2} parent=1 // pred_region
      _
    $region29: #{my_vgg_forward.2} parent=1 // pred_fallthru
      _
    // Predicated region
    $region30: #{my_vgg_forward.2} parent=1 // pred_check
      _
    $region31: #{my_vgg_forward.2} parent=1 // pred_check_branch
      %598 = sbr.rel (0) target = $region33
    $region32: #{my_vgg_forward.2} parent=1 // pred_region
      _
    $region33: #{my_vgg_forward.2} parent=1 // pred_fallthru
      _
    %599 = vsyncpa [#allocation4], 1

</llo_original>
